<compile_context>
chip_gen: v7x
topology: tpu7x:2x2x1
jax: 0.10.0
libtpu: 0.0.40
codegen_flags: <defaults>
</compile_context>

<pallas_src>
import functools

import jax
import jax.numpy as jnp
from jax.experimental import pallas as pl
from jax.experimental.pallas import tpu as pltpu

_LANE = 128
_SUBLANE = 8


# ----------------------------------------------------------------------------- kernel

def res_layer_kernel(x_ref, w10_ref, b10_ref, w2_ref, b2_ref, o_ref):
    d_out = o_ref.shape[-1]                       # padded dim_out (multiple of 128)
    x = x_ref[...]                                # native dtype straight into the MXU

    # Fused first stage: one dot covers fc1 AND the residual projection fc0, so the
    # x tile is consumed once and the MXU keeps streaming through the fc1 epilogue.
    hx = jnp.dot(x, w10_ref[...], preferred_element_type=jnp.float32)
    hx = hx + b10_ref[...].astype(jnp.float32)    # fused [b1 | b0]
    h = jnp.maximum(hx[:, :d_out], 0.0)           # relu(fc1(x));   bn1 is identity
    x_res = hx[:, d_out:]                         # fc0(x)

    y = jnp.dot(h.astype(w2_ref.dtype), w2_ref[...],
                preferred_element_type=jnp.float32)
    y = y + b2_ref[...].astype(jnp.float32)       # fc2(.);         bn2 is identity

    # dropout is identity (dropout=False)
    o_ref[...] = (y + x_res).astype(o_ref.dtype)


# ------------------------------------------------------------------------- utilities

def _round_up(n, m):
    return ((n + m - 1) // m) * m


def _pad2d(a, rows, cols):
    pr, pc = rows - a.shape[0], cols - a.shape[1]
    if pr == 0 and pc == 0:
        return a
    return jnp.pad(a, ((0, pr), (0, pc)))


@functools.lru_cache(maxsize=None)
def _vmem_budget_bytes():
    """Per-generation VMEM budget (v5e/v6e: 128 MiB, v7x: 64 MiB) with headroom."""
    cap = None
    try:
        info = pltpu.get_tpu_info()
        cap = int(getattr(info, "vmem_capacity_bytes", 0)) or None
    except Exception:  # hardware query unavailable -> conservative (v7x-sized) default
        cap = None
    if cap is None:
        cap = 64 * 1024 * 1024
    return int(cap * 0.78)   # leave room for Mosaic-internal scratch / semaphores


@functools.lru_cache(maxsize=None)
def _single_buffering_supported():
    """One-time, narrowly scoped probe: does this jax accept pl.Buffered(1) on a
    grid-invariant pallas_call operand?  Only the tiny probe's failure is caught,
    so compile errors of the real kernel (e.g. a genuine VMEM OOM) are never masked."""
    if not hasattr(pl, "Buffered"):
        return False

    def _copy(w_ref, o_ref):
        o_ref[...] = w_ref[...]

    try:
        probe = pl.pallas_call(
            _copy,
            out_shape=jax.ShapeDtypeStruct((16, 128), jnp.float32),
            grid=(2,),
            in_specs=[pl.BlockSpec((8, 128), lambda i: (0, 0),
                                   pipeline_mode=pl.Buffered(1))],
            out_specs=pl.BlockSpec((8, 128), lambda i: (i, 0)),
        )
        jax.block_until_ready(probe(jnp.zeros((8, 128), jnp.float32)))
        return True
    except Exception:
        return False


@functools.lru_cache(maxsize=None)
def _build_res_layer_call(B_p, D_in_p, D_out_p, bm, dtype, single_buffer, vmem_limit):
    repl = lambda i: (0, 0)   # grid-invariant blocks (weights / biases)
    w_kw = {"pipeline_mode": pl.Buffered(1)} if single_buffer else {}

    return pl.pallas_call(
        res_layer_kernel,
        out_shape=jax.ShapeDtypeStruct((B_p, D_out_p), dtype),
        grid_spec=pltpu.PrefetchScalarGridSpec(
            num_scalar_prefetch=0,
            grid=(B_p // bm,),
            in_specs=[
                pl.BlockSpec((bm, D_in_p), lambda i: (i, 0)),          # x tile
                pl.BlockSpec((D_in_p, 2 * D_out_p), repl, **w_kw),     # [w1 | w0]
                pl.BlockSpec((1, 2 * D_out_p), repl, **w_kw),          # [b1 | b0]
                pl.BlockSpec((D_out_p, D_out_p), repl, **w_kw),        # w2
                pl.BlockSpec((1, D_out_p), repl, **w_kw),              # b2
            ],
            out_specs=pl.BlockSpec((bm, D_out_p), lambda i: (i, 0)),
        ),
        compiler_params=pltpu.CompilerParams(
            dimension_semantics=("parallel",),
            vmem_limit_bytes=int(vmem_limit),
        ),
    )


# -------------------------------------------------------------------------- wrappers

def prepare_res_layer_params(w1, b1, w2, b2, w0, b0):
    """One-time weight prep (call at init, NOT per forward):
    pad feature dims to multiples of 128 (lane-dense loads, full MXU tiles) and fuse
    [w1 | w0] / [b1 | b0] so the kernel issues a single x @ [w1|w0] matmul.
    Zero padding contributes exactly 0 through matmuls / bias / ReLU."""
    dim_in, dim_out = w1.shape
    D_in_p = _round_up(dim_in, _LANE)
    D_out_p = _round_up(dim_out, _LANE)

    b1 = b1.reshape(1, -1)
    b2 = b2.reshape(1, -1)
    b0 = b0.reshape(1, -1)

    w10 = jnp.concatenate(
        [_pad2d(w1, D_in_p, D_out_p), _pad2d(w0, D_in_p, D_out_p)], axis=1)
    b10 = jnp.concatenate(
        [_pad2d(b1, 1, D_out_p), _pad2d(b0, 1, D_out_p)], axis=1)
    w2p = _pad2d(w2, D_out_p, D_out_p)
    b2p = _pad2d(b2, 1, D_out_p)

    return {"w10": w10, "b10": b10, "w2": w2p, "b2": b2p,
            "dim_in": dim_in, "dim_out": dim_out}


def res_layer(x, params, *, bm_max=512, min_rows_for_core_split=128):
    """y = fc2(relu(fc1(x))) + fc0(x), with bn/dropout disabled (identity)."""
    B, dim_in = x.shape
    assert dim_in == params["dim_in"], "dim_in mismatch vs prepared params"
    dim_out = params["dim_out"]
    w10, b10, w2, b2 = params["w10"], params["b10"], params["w2"], params["b2"]
    D_in_p, two_dout = w10.shape
    D_out_p = two_dout // 2
    dtype = jnp.dtype(x.dtype)

    # Batch tiling: pick the tile COUNT first, then the tile size — avoids padding
    # nearly a full tile when B is just above a multiple of bm_max.
    n_tiles = max(1, pl.cdiv(B, bm_max))
    # Batches big enough to be compute-bound get >= 2 grid steps so the 'parallel'
    # axis can shard across both TensorCores on v7x; tiny weight-DMA-bound batches
    # keep one step (each extra core would re-DMA its own resident weight copy).
    if n_tiles == 1 and B >= min_rows_for_core_split:
        n_tiles = 2
    bm = _round_up(pl.cdiv(B, n_tiles), _SUBLANE)
    B_p = bm * n_tiles

    single_buffer = _single_buffering_supported()

    # VMEM accounting (double-buffering only counted where it actually happens).
    itemsize = dtype.itemsize
    wbuf = 1 if single_buffer else 2
    weight_bytes = (D_in_p * 2 * D_out_p + D_out_p * D_out_p + 3 * D_out_p) * itemsize * wbuf
    act_bytes = 2 * bm * (D_in_p + D_out_p) * itemsize            # double-buffered x / out tiles
    tmp_bytes = bm * 3 * D_out_p * 4 + bm * D_out_p * itemsize    # f32 hx, y + cast of h
    need = weight_bytes + act_bytes + tmp_bytes + (4 << 20)       # + Mosaic headroom
    budget = _vmem_budget_bytes()
    if need > budget:
        # TODO(synk): K/N-tiled accumulator path for weights that don't fit VMEM.
        raise NotImplementedError(
            f"ResLayer resident-weight schedule needs ~{need / 2**20:.1f} MiB VMEM "
            f"but the per-chip budget is {budget / 2**20:.1f} MiB; the K-tiled "
            f"fallback is not implemented.")
    vmem_limit = min(budget, max(need, 32 << 20))

    # Only x is padded per call (rows to bm multiple, features to 128 multiple);
    # weights were padded once in prepare_res_layer_params.
    if B_p != B or D_in_p != dim_in:
        xp = jnp.pad(x, ((0, B_p - B), (0, D_in_p - dim_in)))
    else:
        xp = x

    call = _build_res_layer_call(B_p, D_in_p, D_out_p, bm, dtype,
                                 single_buffer, int(vmem_limit))
    out_p = call(xp, w10, b10, w2, b2)
    return out_p[:B, :dim_out]


# --------------------------------------------------------------- init / reference

def init_res_layer_params(key, dim_in, dim_out, dtype=jnp.float32):
    """Deterministic synthetic init (PyTorch Linear shapes: W (out,in), b (out,)).
    Weights are returned pre-transposed to (in, out) for the x @ W convention."""
    ks = jax.random.split(key, 6)

    def lin(kw, kb, fan_in, fan_out):
        bound = 1.0 / jnp.sqrt(fan_in)
        w = jax.random.uniform(kw, (fan_out, fan_in), dtype, -bound, bound)
        b = jax.random.uniform(kb, (fan_out,), dtype, -bound, bound)
        return w.T, b.reshape(1, fan_out)  # (in, out), (1, out)

    w1, b1 = lin(ks[0], ks[1], dim_in, dim_out)   # fc1
    w2, b2 = lin(ks[2], ks[3], dim_out, dim_out)  # fc2
    w0, b0 = lin(ks[4], ks[5], dim_in, dim_out)   # fc0 (dim_in != dim_out)
    return w1, b1, w2, b2, w0, b0


def res_layer_ref(x, w1, b1, w2, b2, w0, b0):
    x32 = x.astype(jnp.float32)
    x_res = x32 @ w0.astype(jnp.float32) + b0.astype(jnp.float32)
    h = jnp.maximum(x32 @ w1.astype(jnp.float32) + b1.astype(jnp.float32), 0.0)
    y = h @ w2.astype(jnp.float32) + b2.astype(jnp.float32)
    return y + x_res


# --------------------------------------------------------------------------- main

if __name__ == "__main__":
    key = jax.random.PRNGKey(0)
    k_x, k_p, k_x2, k_x3 = jax.random.split(key, 4)

    B, dim_in, dim_out = 8, 32, 64
    x = jax.random.normal(k_x, (B, dim_in), jnp.float32)
    raw = init_res_layer_params(k_p, dim_in, dim_out, jnp.float32)
    params = prepare_res_layer_params(*raw)           # one-time pad + fuse

    # f32 correctness check.
    out = jax.block_until_ready(res_layer(x, params))
    ref = res_layer_ref(x, *raw)
    assert out.shape == (B, dim_out)
    assert jnp.allclose(out, ref, atol=1e-5, rtol=1e-5)

    # Ragged batch (exercises the caller-side row padding; weights are pre-padded).
    x_r = jax.random.normal(k_x2, (5, dim_in), jnp.float32)
    out_r = jax.block_until_ready(res_layer(x_r, params))
    assert out_r.shape == (5, dim_out)
    assert jnp.allclose(out_r, res_layer_ref(x_r, *raw), atol=1e-5, rtol=1e-5)

    # Multi-tile batch (>= 128 rows -> 2 grid steps; megacore-shardable on v7x).
    x_m = jax.random.normal(k_x3, (160, dim_in), jnp.float32)
    out_m = jax.block_until_ready(res_layer(x_m, params))
    assert out_m.shape == (160, dim_out)
    assert jnp.allclose(out_m, res_layer_ref(x_m, *raw), atol=1e-5, rtol=1e-5)

    # bf16 smoke test (bf16 MXU operands, f32 accumulation); loose tolerance.
    raw_b = tuple(p.astype(jnp.bfloat16) for p in raw)
    params_b = prepare_res_layer_params(*raw_b)
    out_b = jax.block_until_ready(res_layer(x.astype(jnp.bfloat16), params_b))
    assert out_b.shape == (B, dim_out)
    out_b32 = out_b.astype(jnp.float32)
    assert bool(jnp.all(jnp.isfinite(out_b32)))
    assert jnp.allclose(out_b32, ref, atol=1e-1, rtol=1e-1)

    print("KERNEL_OK")
</pallas_src>

<mosaic_0001>
module attributes {stable_mosaic.version = 11 : i64} {
  func.func @_copy(%arg0: i32, %arg1: memref<8x128xf32, #tpu.memory_space<vmem>>, %arg2: memref<8x128xf32, #tpu.memory_space<vmem>>) attributes {dimension_semantics = [#tpu.dimension_semantics<arbitrary>], iteration_bounds = array<i64: 2>, scalar_prefetch = 0 : i64, scratch_operands = 0 : i64, tpu.core_type = #tpu.core_type<tc>, window_params = [{pipeline_mode = #tpu.pipeline_mode<synchronous>, transform_indices = @transform_0, window_bounds = array<i64: 8, 128>}, {transform_indices = @transform_1, window_bounds = array<i64: 8, 128>}]} {
    %c0 = arith.constant 0 : index
    %c0_0 = arith.constant 0 : index
    %0 = vector.load %arg1[%c0, %c0_0] : memref<8x128xf32, #tpu.memory_space<vmem>>, vector<8x128xf32>
    %c0_1 = arith.constant 0 : index
    %c0_2 = arith.constant 0 : index
    %1 = vector.load %arg2[%c0_1, %c0_2] : memref<8x128xf32, #tpu.memory_space<vmem>>, vector<8x128xf32>
    tpu.vector_store %arg2[%c0_1, %c0_2], %0 {strides = array<i32>} : memref<8x128xf32, #tpu.memory_space<vmem>>, vector<8x128xf32>,
    return
  }
  func.func @transform_0(%arg0: i32) -> (i32, i32) {
    %c0_i32 = arith.constant 0 : i32
    %c0_i32_0 = arith.constant 0 : i32
    %c0_i32_1 = arith.constant 0 : i32
    return %c0_i32, %c0_i32_0 : i32, i32
  }
  func.func @transform_1(%arg0: i32) -> (i32, i32) {
    %c0_i32 = arith.constant 0 : i32
    %c0_i32_0 = arith.constant 0 : i32
    return %arg0, %c0_i32 : i32, i32
  }
}

module attributes {stable_mosaic.version = 11 : i64} {
  func.func @res_layer_kernel(%arg0: i32, %arg1: memref<8x128xf32, #tpu.memory_space<vmem>>, %arg2: memref<128x256xf32, #tpu.memory_space<vmem>>, %arg3: memref<1x256xf32, #tpu.memory_space<vmem>>, %arg4: memref<128x128xf32, #tpu.memory_space<vmem>>, %arg5: memref<1x128xf32, #tpu.memory_space<vmem>>, %arg6: memref<8x128xf32, #tpu.memory_space<vmem>>) attributes {dimension_semantics = [#tpu.dimension_semantics<parallel>], iteration_bounds = array<i64: 1>, scalar_prefetch = 0 : i64, scratch_operands = 0 : i64, tpu.core_type = #tpu.core_type<tc>, window_params = [{transform_indices = @transform_0, window_bounds = array<i64: 8, 128>}, {pipeline_mode = #tpu.pipeline_mode<synchronous>, transform_indices = @transform_1, window_bounds = array<i64: 128, 256>}, {pipeline_mode = #tpu.pipeline_mode<synchronous>, transform_indices = @transform_2, window_bounds = array<i64: 1, 256>}, {pipeline_mode = #tpu.pipeline_mode<synchronous>, transform_indices = @transform_3, window_bounds = array<i64: 128, 128>}, {pipeline_mode = #tpu.pipeline_mode<synchronous>, transform_indices = @transform_4, window_bounds = array<i64: 1, 128>}, {transform_indices = @transform_5, window_bounds = array<i64: 8, 128>}]} {
    %c0 = arith.constant 0 : index
    %c0_0 = arith.constant 0 : index
    %0 = vector.load %arg1[%c0, %c0_0] : memref<8x128xf32, #tpu.memory_space<vmem>>, vector<8x128xf32>
    %c0_1 = arith.constant 0 : index
    %c0_2 = arith.constant 0 : index
    %1 = vector.load %arg2[%c0_1, %c0_2] : memref<128x256xf32, #tpu.memory_space<vmem>>, vector<128x256xf32>
    %cst = arith.constant dense<0.000000e+00> : vector<8x256xf32>
    %2 = tpu.matmul %0, %1, %cst {dimension_numbers = #tpu.dot_dimension_numbers<[1], [0], [0], [1], [0, 0, 1, 1], [], []>} : vector<8x128xf32>, vector<128x256xf32>, vector<8x256xf32> -> vector<8x256xf32>
    %c0_3 = arith.constant 0 : index
    %c0_4 = arith.constant 0 : index
    %3 = vector.load %arg3[%c0_3, %c0_4] : memref<1x256xf32, #tpu.memory_space<vmem>>, vector<1x256xf32>
    %4 = vector.broadcast %3 : vector<1x256xf32> to vector<8x256xf32>
    %5 = arith.addf %2, %4 : vector<8x256xf32>
    %6 = vector.extract_strided_slice %5 {offsets = [0, 0], sizes = [8, 128], strides = [1, 1]} : vector<8x256xf32> to vector<8x128xf32>
    %cst_5 = arith.constant 0.000000e+00 : f32
    %7 = vector.broadcast %cst_5 : f32 to vector<8x128xf32>
    %8 = arith.maximumf %6, %7 : vector<8x128xf32>
    %9 = vector.extract_strided_slice %5 {offsets = [0, 128], sizes = [8, 128], strides = [1, 1]} : vector<8x256xf32> to vector<8x128xf32>
    %c0_6 = arith.constant 0 : index
    %c0_7 = arith.constant 0 : index
    %10 = vector.load %arg4[%c0_6, %c0_7] : memref<128x128xf32, #tpu.memory_space<vmem>>, vector<128x128xf32>
    %cst_8 = arith.constant dense<0.000000e+00> : vector<8x128xf32>
    %11 = tpu.matmul %8, %10, %cst_8 {dimension_numbers = #tpu.dot_dimension_numbers<[1], [0], [0], [1], [0, 0, 1, 1], [], []>} : vector<8x128xf32>, vector<128x128xf32>, vector<8x128xf32> -> vector<8x128xf32>
    %c0_9 = arith.constant 0 : index
    %c0_10 = arith.constant 0 : index
    %12 = vector.load %arg5[%c0_9, %c0_10] : memref<1x128xf32, #tpu.memory_space<vmem>>, vector<1x128xf32>
    %13 = vector.broadcast %12 : vector<1x128xf32> to vector<8x128xf32>
    %14 = arith.addf %11, %13 : vector<8x128xf32>
    %15 = arith.addf %14, %9 : vector<8x128xf32>
    %c0_11 = arith.constant 0 : index
    %c0_12 = arith.constant 0 : index
    %16 = vector.load %arg6[%c0_11, %c0_12] : memref<8x128xf32, #tpu.memory_space<vmem>>, vector<8x128xf32>
    tpu.vector_store %arg6[%c0_11, %c0_12], %15 {strides = array<i32>} : memref<8x128xf32, #tpu.memory_space<vmem>>, vector<8x128xf32>,
    return
  }
  func.func @transform_0(%arg0: i32) -> (i32, i32) {
    %c0_i32 = arith.constant 0 : i32
    %c0_i32_0 = arith.constant 0 : i32
    return %arg0, %c0_i32 : i32, i32
  }
  func.func @transform_1(%arg0: i32) -> (i32, i32) {
    %c0_i32 = arith.constant 0 : i32
    %c0_i32_0 = arith.constant 0 : i32
    %c0_i32_1 = arith.constant 0 : i32
    return %c0_i32, %c0_i32_0 : i32, i32
  }
  func.func @transform_2(%arg0: i32) -> (i32, i32) {
    %c0_i32 = arith.constant 0 : i32
    %c0_i32_0 = arith.constant 0 : i32
    %c0_i32_1 = arith.constant 0 : i32
    return %c0_i32, %c0_i32_0 : i32, i32
  }
  func.func @transform_3(%arg0: i32) -> (i32, i32) {
    %c0_i32 = arith.constant 0 : i32
    %c0_i32_0 = arith.constant 0 : i32
    %c0_i32_1 = arith.constant 0 : i32
    return %c0_i32, %c0_i32_0 : i32, i32
  }
  func.func @transform_4(%arg0: i32) -> (i32, i32) {
    %c0_i32 = arith.constant 0 : i32
    %c0_i32_0 = arith.constant 0 : i32
    %c0_i32_1 = arith.constant 0 : i32
    return %c0_i32, %c0_i32_0 : i32, i32
  }
  func.func @transform_5(%arg0: i32) -> (i32, i32) {
    %c0_i32 = arith.constant 0 : i32
    %c0_i32_0 = arith.constant 0 : i32
    return %arg0, %c0_i32 : i32, i32
  }
}

</mosaic_0001>

<llo_original>
// kernel: tpu_custom_call.1
$region0: #{tpu_custom_call.1}
  #allocation0 [shape = 'u32[]', space=smem, size = 0x4, offset = 0x4, fixed_abs, tag = 'smem constant byte address 0x4 - core index']
  #allocation1 [shape = 'u32[144,128]{1,0:T(1,128)}', space=vmem, size = 0x12000, scoped, tag = 'internal scratch']
  %s0 = inlined_call_operand.hbm [shape: f32[8,128], index: 0, kind: input, shape index: {}]
  %s1 = inlined_call_operand.hbm [shape: f32[16,128], index: 1, kind: output, shape index: {}]
  %s2 = sld [smem:[#allocation0]]
  $region41: #{tpu_custom_call.1} parent=0
    _
  %s4 = ssub.s32 1, %s2
  %s5 = scalar_select 0, %s4, %s2
  $region1: #{tpu_custom_call.1} parent=0
    #allocation2 [shape = 'u8[4096]{0}', space=vmem, size = 0x1000, scoped, tag = 'input window, operand 0, single buffered']
    #allocation3 [shape = 's32[2]{0}', space=sflag, size = 0x8, scoped, tag = 'scoped memory for tpu_custom_call.1']
    #allocation4 [shape = 's32[2]{0}', space=sflag, size = 0x8, scoped, tag = 'scoped memory for tpu_custom_call.1']
    #allocation5 [shape = 'u8[8192]{0}', space=vmem, size = 0x2000, scoped, tag = 'output window, operand 0']
    %6 = vsyncpa [#allocation3], 0
    %7 = vsyncpa [#allocation4], 0
    %s8 = scalar_lea.sflag [#allocation4], 1
    %9 = vsyncpa %s8, 0
    loop: start=0, step=1, limit=4
    $region2: #{tpu_custom_call.1} parent=1 // loop_pre_header
      _
    $region3: #{tpu_custom_call.1} parent=1 // loop_header
      %s11 = sphi 0, %s15
      %p12 = scmp.ge.s32.totalorder %s11, 4
      %s19 = sphi 0, %s19
      %s21 = sphi 0, %s19
      %s22 = sphi 0, %s21
      %s36 = sphi 0, %s22
      %s42 = sphi 0, %s44
      %s45 = sphi 0, %s42
      %s46 = sphi 0, %s45
      %s62 = sphi 0, %s46
    $region4: #{tpu_custom_call.1} parent=1 // loop_header_branch
      %14 = sbr.rel (%p12) target = $region8
    $region5: #{tpu_custom_call.1} parent=1 // loop_body
      %s16 = ssub.s32 %s11, 1
      %s17 = ssub.s32 %s11, 2
      %s18 = sadd.s32 %s11, 1
      %s20 = sadd.s32 %s19, 1
      %p23 = scmp.eq.s32.totalorder %s11, 1
      %p24 = scmp.ne.s32.totalorder %s19, %s21
      %p25 = scmp.eq.s32.totalorder %s11, 0
      %p26 = por %p24, %p25
      %p27 = scmp.ne.s32.totalorder %s19, %s21
      %p28 = scmp.eq.s32.totalorder %s16, 1
      %p29 = por %p27, %p28
      %p30 = scmp.ne.s32.totalorder %s21, %s22
      %p31 = scmp.eq.s32.totalorder %s16, 0
      %p32 = por %p30, %p31
      %p33 = scmp.ne.s32.totalorder %s21, %s22
      %p34 = scmp.eq.s32.totalorder %s17, 1
      %p35 = por %p33, %p34
      %p37 = scmp.ne.s32.totalorder %s22, %s36
      %p38 = scmp.eq.s32.totalorder %s17, 0
      %p39 = por %p37, %p38
      %s40 = ssub.s32 %s11, %s18
      %p41 = scmp.eq.s32.totalorder %s40, 0
      %s43 = sadd.s32 %s42, 1
      %s44 = scalar_select %p41, %s42, %s43
      %p47 = pneg %p41
      %p48 = scmp.eq.s32.totalorder %s11, 1
      %p49 = por %p47, %p48
      %p50 = scmp.ne.s32.totalorder %s42, %s45
      %p51 = scmp.eq.s32.totalorder %s11, 0
      %p52 = por %p50, %p51
      %p53 = scmp.ne.s32.totalorder %s42, %s45
      %p54 = scmp.eq.s32.totalorder %s16, 1
      %p55 = por %p53, %p54
      %p56 = scmp.ne.s32.totalorder %s45, %s46
      %p57 = scmp.eq.s32.totalorder %s16, 0
      %p58 = por %p56, %p57
      %p59 = scmp.ne.s32.totalorder %s45, %s46
      %p60 = scmp.eq.s32.totalorder %s17, 1
      %p61 = por %p59, %p60
      %p63 = scmp.ne.s32.totalorder %s46, %s62
      %p64 = scmp.eq.s32.totalorder %s17, 0
      %p65 = por %p63, %p64
      %p66 = scmp.le.s32.totalorder 1, %s11
      %p67 = scmp.lt.s32.totalorder %s11, 3
      %p68 = pnand %p66, %p67
      %p69 = pneg %p68
      // Predicated region
      $region9: #{tpu_custom_call.1} parent=5 // pred_check
        _
      $region10: #{tpu_custom_call.1} parent=5 // pred_check_branch
        %71 = sbr.rel (%p68) target = $region12
      $region11: #{tpu_custom_call.1} parent=5 // pred_region
        %s72 = ssub.s32 %s11, 1
        // Predicated region
        $region13: #{tpu_custom_call.1} parent=11 // pred_check
          %p73 = pneg %p32
        $region14: #{tpu_custom_call.1} parent=11 // pred_check_branch
          %75 = sbr.rel (%p73) target = $region16
        $region15: #{tpu_custom_call.1} parent=11 // pred_region
          %s77 = ssub.s32 128, 128
          %78 = vsyncadd [#allocation3], %s77
          %s80 = sshll.u32 [#allocation2], 4
          %s81 = int_to_ptr.vmem [resolvable:$true] %s80
          %83 = dma.hbm_to_vmem [thread:$0]  %s0, 128, %s81, [#allocation3]
        $region16: #{tpu_custom_call.1} parent=11 // pred_fallthru
          _
      $region12: #{tpu_custom_call.1} parent=5 // pred_fallthru
        _
      %p84 = scmp.lt.s32.totalorder %s11, 2
      // Predicated region
      $region17: #{tpu_custom_call.1} parent=5 // pred_check
        %p85 = pneg %p84
      $region18: #{tpu_custom_call.1} parent=5 // pred_check_branch
        %87 = sbr.rel (%p85) target = $region20
      $region19: #{tpu_custom_call.1} parent=5 // pred_region
        _
      $region20: #{tpu_custom_call.1} parent=5 // pred_fallthru
        _
      %p88 = scmp.le.s32.totalorder 1, %s11
      %p89 = scmp.lt.s32.totalorder %s11, 3
      %p90 = pnand %p88, %p89
      %p91 = pneg %p90
      // Predicated region
      $region21: #{tpu_custom_call.1} parent=5 // pred_check
        _
      $region22: #{tpu_custom_call.1} parent=5 // pred_check_branch
        %93 = sbr.rel (%p90) target = $region24
      $region23: #{tpu_custom_call.1} parent=5 // pred_region
        %s94 = ssub.s32 %s11, 1
        // Predicated region
        $region25: #{tpu_custom_call.1} parent=23 // pred_check
          %p95 = pneg %p32
        $region26: #{tpu_custom_call.1} parent=23 // pred_check_branch
          %97 = sbr.rel (%p95) target = $region28
        $region27: #{tpu_custom_call.1} parent=23 // pred_region
          %98 = dma.done [#allocation3], 128
        $region28: #{tpu_custom_call.1} parent=23 // pred_fallthru
          _
        %p99 = pneg %p32
        %p100 = pneg %p29
        %p101 = pneg %p58
        %p102 = pneg %p55
        %s103 = sand.u32 %s45, 1
        %s104 = scalar_lea.sflag [#allocation4], %s103
        %s105 = sand.u32 %s45, 1
        %s106 = smul.addr %s105, 8
        %s107 = scalar_lea.vmem [#allocation5], %s106
        %v108 = vld [vmem:[#allocation2] sm:$0xff]
        %109 = vst [vmem:[%s107] sm:$0xff] %v108
        %s110 = sand.u32 %s45, 1
        %s111 = scalar_lea.sflag [#allocation4], %s110
        %s112 = sand.u32 %s45, 1
        %s113 = smul.addr %s112, 8
        %s114 = scalar_lea.vmem [#allocation5], %s113
        // Predicated region
        $region29: #{tpu_custom_call.1} parent=23 // pred_check
          %p115 = pneg %p55
        $region30: #{tpu_custom_call.1} parent=23 // pred_check_branch
          %117 = sbr.rel (%p115) target = $region32
        $region31: #{tpu_custom_call.1} parent=23 // pred_region
          %s119 = ssub.s32 128, 128
          %120 = vsyncadd %s111, %s119
          %s121 = smul.addr %s16, 128
          %s122 = scalar_lea.hbm %s1, %s121
          %s124 = sshll.u32 %s114, 4
          %s125 = int_to_ptr.vmem [resolvable:$true] %s124
          %127 = dma.vmem_to_hbm [thread:$0]  %s125, 128, %s122, %s111
        $region32: #{tpu_custom_call.1} parent=23 // pred_fallthru
          _
      $region24: #{tpu_custom_call.1} parent=5 // pred_fallthru
        _
      %p128 = scmp.le.s32.totalorder 2, %s11
      // Predicated region
      $region33: #{tpu_custom_call.1} parent=5 // pred_check
        %p129 = pneg %p128
      $region34: #{tpu_custom_call.1} parent=5 // pred_check_branch
        %131 = sbr.rel (%p129) target = $region36
      $region35: #{tpu_custom_call.1} parent=5 // pred_region
        %s132 = ssub.s32 %s11, 2
        // Predicated region
        $region37: #{tpu_custom_call.1} parent=35 // pred_check
          %p133 = pneg %p61
        $region38: #{tpu_custom_call.1} parent=35 // pred_check_branch
          %135 = sbr.rel (%p133) target = $region40
        $region39: #{tpu_custom_call.1} parent=35 // pred_region
          %s136 = sand.u32 %s46, 1
          %s137 = scalar_lea.sflag [#allocation4], %s136
          %s138 = sand.u32 %s46, 1
          %s139 = smul.addr %s138, 8
          %s140 = scalar_lea.vmem [#allocation5], %s139
          %141 = dma.done %s137, 128
        $region40: #{tpu_custom_call.1} parent=35 // pred_fallthru
          _
      $region36: #{tpu_custom_call.1} parent=5 // pred_fallthru
        _
    $region6: #{tpu_custom_call.1} parent=1 // loop_footer
      %s15 = sadd.s32 1, %s11
    $region7: #{tpu_custom_call.1} parent=1 // loop_footer_branch
      %10 = sbr.rel target = $region3
    $region8: #{tpu_custom_call.1} parent=1 // loop_exit
      _
    %142 = vsyncpa [#allocation3], 1
    %s143 = scalar_lea.sflag [#allocation3], 1
    %144 = vsyncpa %s143, 1
    %145 = vsyncpa [#allocation4], 1
    %s146 = scalar_lea.sflag [#allocation4], 1
    %147 = vsyncpa %s146, 1

// kernel: tpu_custom_call.1
$region0: #{tpu_custom_call.1}
  #allocation0 [shape = 'u32[]', space=smem, size = 0x4, offset = 0x4, fixed_abs, tag = 'smem constant byte address 0x4 - core index']
  #allocation1 [shape = 'u32[144,128]{1,0:T(1,128)}', space=vmem, size = 0x12000, scoped, tag = 'internal scratch']
  %s0 = inlined_call_operand.hbm [shape: f32[8,128], index: 0, kind: input, shape index: {}]
  %s1 = inlined_call_operand.hbm [shape: f32[128,256], index: 1, kind: input, shape index: {}]
  %s2 = inlined_call_operand.vmem [shape: f32[1,256], index: 2, kind: input, shape index: {}]
  %s3 = inlined_call_operand.hbm [shape: f32[128,128], index: 3, kind: input, shape index: {}]
  %s4 = inlined_call_operand.vmem [shape: f32[1,128], index: 4, kind: input, shape index: {}]
  %s5 = inlined_call_operand.hbm [shape: f32[8,128], index: 5, kind: output, shape index: {}]
  %s6 = sld [smem:[#allocation0]]
  $region42: #{tpu_custom_call.1} parent=0
    _
  %s8 = ssub.s32 1, %s6
  %s9 = scalar_select 0, %s8, %s6
  $region1: #{tpu_custom_call.1} parent=0
    #allocation2 [shape = 'u8[4096]{0}', space=vmem, size = 0x1000, scoped, tag = 'input window, operand 0, single buffered']
    #allocation3 [shape = 's32[1]{0}', space=sflag, size = 0x4, scoped, tag = 'scoped memory for tpu_custom_call.1']
    #allocation4 [shape = 's32[1]{0}', space=sflag, size = 0x4, scoped, tag = 'scoped memory for tpu_custom_call.1']
    #allocation5 [shape = 'u8[131072]{0}', space=vmem, size = 0x20000, scoped, tag = 'input window, operand 1, single buffered']
    #allocation6 [shape = 's32[1]{0}', space=sflag, size = 0x4, scoped, tag = 'scoped memory for tpu_custom_call.1']
    #allocation7 [shape = 'u8[65536]{0}', space=vmem, size = 0x10000, scoped, tag = 'input window, operand 3, single buffered']
    #allocation8 [shape = 'u8[4096]{0}', space=vmem, size = 0x1000, scoped, tag = 'output window, operand 0, single buffered']
    %10 = vsyncpa [#allocation3], 0
    %11 = vsyncpa [#allocation6], 0
    %12 = vsyncpa [#allocation4], 0
    // Predicated region
    $region2: #{tpu_custom_call.1} parent=1 // pred_check
      _
    $region3: #{tpu_custom_call.1} parent=1 // pred_check_branch
      %14 = sbr.rel (0) target = $region5
    $region4: #{tpu_custom_call.1} parent=1 // pred_region
      %s16 = ssub.s32 128, 128
      %17 = vsyncadd [#allocation3], %s16
      %s19 = sshll.u32 [#allocation2], 4
      %s20 = int_to_ptr.vmem [resolvable:$true] %s19
      %22 = dma.hbm_to_vmem [thread:$0]  %s0, 128, %s20, [#allocation3]
    $region5: #{tpu_custom_call.1} parent=1 // pred_fallthru
      _
    // Predicated region
    $region6: #{tpu_custom_call.1} parent=1 // pred_check
      _
    $region7: #{tpu_custom_call.1} parent=1 // pred_check_branch
      %24 = sbr.rel (0) target = $region9
    $region8: #{tpu_custom_call.1} parent=1 // pred_region
      %s26 = ssub.s32 4096, 4096
      %27 = vsyncadd [#allocation6], %s26
      %s28 = sshll.u32 [#allocation5], 4
      %s29 = int_to_ptr.vmem [resolvable:$true] %s28
      %34 = dma.hbm_to_vmem [thread:$0]  %s1, 4096, %s29, [#allocation6], 256, 256, 16
    $region9: #{tpu_custom_call.1} parent=1 // pred_fallthru
      _
    // Predicated region
    $region10: #{tpu_custom_call.1} parent=1 // pred_check
      _
    $region11: #{tpu_custom_call.1} parent=1 // pred_check_branch
      %36 = sbr.rel (0) target = $region13
    $region12: #{tpu_custom_call.1} parent=1 // pred_region
      _
    $region13: #{tpu_custom_call.1} parent=1 // pred_fallthru
      _
    // Predicated region
    $region14: #{tpu_custom_call.1} parent=1 // pred_check
      _
    $region15: #{tpu_custom_call.1} parent=1 // pred_check_branch
      %38 = sbr.rel (0) target = $region17
    $region16: #{tpu_custom_call.1} parent=1 // pred_region
      %s40 = ssub.s32 2048, 2048
      %41 = vsyncadd [#allocation6], %s40
      %s42 = sshll.u32 [#allocation7], 4
      %s43 = int_to_ptr.vmem [resolvable:$true] %s42
      %48 = dma.hbm_to_vmem [thread:$0]  %s3, 2048, %s43, [#allocation6], 128, 128, 8
    $region17: #{tpu_custom_call.1} parent=1 // pred_fallthru
      _
    // Predicated region
    $region18: #{tpu_custom_call.1} parent=1 // pred_check
      _
    $region19: #{tpu_custom_call.1} parent=1 // pred_check_branch
      %50 = sbr.rel (0) target = $region21
    $region20: #{tpu_custom_call.1} parent=1 // pred_region
      _
    $region21: #{tpu_custom_call.1} parent=1 // pred_fallthru
      _
    // Predicated region
    $region22: #{tpu_custom_call.1} parent=1 // pred_check
      _
    $region23: #{tpu_custom_call.1} parent=1 // pred_check_branch
      %52 = sbr.rel (0) target = $region25
    $region24: #{tpu_custom_call.1} parent=1 // pred_region
      %53 = dma.done [#allocation3], 128
    $region25: #{tpu_custom_call.1} parent=1 // pred_fallthru
      _
    // Predicated region
    $region26: #{tpu_custom_call.1} parent=1 // pred_check
      _
    $region27: #{tpu_custom_call.1} parent=1 // pred_check_branch
      %55 = sbr.rel (0) target = $region29
    $region28: #{tpu_custom_call.1} parent=1 // pred_region
      %56 = dma.done [#allocation6], 4096
    $region29: #{tpu_custom_call.1} parent=1 // pred_fallthru
      _
    // Predicated region
    $region30: #{tpu_custom_call.1} parent=1 // pred_check
      _
    $region31: #{tpu_custom_call.1} parent=1 // pred_check_branch
      %58 = sbr.rel (0) target = $region33
    $region32: #{tpu_custom_call.1} parent=1 // pred_region
      %59 = dma.done [#allocation6], 2048
    $region33: #{tpu_custom_call.1} parent=1 // pred_fallthru
      _
    %v60 = vld [vmem:[#allocation2] sm:$0xff]
    %v61 = vld [vmem:[#allocation5] sm:$0xff]
    %v62 = vld [vmem:[#allocation5 + $0x8] sm:$0xff]
    %v63 = vld [vmem:[#allocation5 + $0x10] sm:$0xff]
    %v64 = vld [vmem:[#allocation5 + $0x18] sm:$0xff]
    %v65 = vld [vmem:[#allocation5 + $0x20] sm:$0xff]
    %v66 = vld [vmem:[#allocation5 + $0x28] sm:$0xff]
    %v67 = vld [vmem:[#allocation5 + $0x30] sm:$0xff]
    %v68 = vld [vmem:[#allocation5 + $0x38] sm:$0xff]
    %v69 = vld [vmem:[#allocation5 + $0x40] sm:$0xff]
    %v70 = vld [vmem:[#allocation5 + $0x48] sm:$0xff]
    %v71 = vld [vmem:[#allocation5 + $0x50] sm:$0xff]
    %v72 = vld [vmem:[#allocation5 + $0x58] sm:$0xff]
    %v73 = vld [vmem:[#allocation5 + $0x60] sm:$0xff]
    %v74 = vld [vmem:[#allocation5 + $0x68] sm:$0xff]
    %v75 = vld [vmem:[#allocation5 + $0x70] sm:$0xff]
    %v76 = vld [vmem:[#allocation5 + $0x78] sm:$0xff]
    %v77 = vld [vmem:[#allocation5 + $0x80] sm:$0xff]
    %v78 = vld [vmem:[#allocation5 + $0x88] sm:$0xff]
    %v79 = vld [vmem:[#allocation5 + $0x90] sm:$0xff]
    %v80 = vld [vmem:[#allocation5 + $0x98] sm:$0xff]
    %v81 = vld [vmem:[#allocation5 + $0xa0] sm:$0xff]
    %v82 = vld [vmem:[#allocation5 + $0xa8] sm:$0xff]
    %v83 = vld [vmem:[#allocation5 + $0xb0] sm:$0xff]
    %v84 = vld [vmem:[#allocation5 + $0xb8] sm:$0xff]
    %v85 = vld [vmem:[#allocation5 + $0xc0] sm:$0xff]
    %v86 = vld [vmem:[#allocation5 + $0xc8] sm:$0xff]
    %v87 = vld [vmem:[#allocation5 + $0xd0] sm:$0xff]
    %v88 = vld [vmem:[#allocation5 + $0xd8] sm:$0xff]
    %v89 = vld [vmem:[#allocation5 + $0xe0] sm:$0xff]
    %v90 = vld [vmem:[#allocation5 + $0xe8] sm:$0xff]
    %v91 = vld [vmem:[#allocation5 + $0xf0] sm:$0xff]
    %v92 = vld [vmem:[#allocation5 + $0xf8] sm:$0xff]
    %v93 = vld [vmem:[%s2] sm:$0x3]
    %v95 = vlaneseq
    %v96 = vshrl.u32 %v95, 7
    %v97 = vsub.s32 0, %v96
    %v98 = vrot.slane %v93, %v97
    %v99 = vlaneseq
    %v100 = vshrl.u32 %v99, 7
    %v101 = vsub.s32 1, %v100
    %v102 = vrot.slane %v93, %v101
    %105 = vmatprep.subr.mxu0 %v62
    %106 = vmatpush1.msra.mxu0 %v61
    %107 = vmatprep.subr.mxu0 %v64
    %108 = vmatpush1.msra.mxu0 %v63
    %109 = vmatprep.subr.mxu0 %v66
    %110 = vmatpush1.msra.mxu0 %v65
    %111 = vmatprep.subr.mxu0 %v68
    %112 = vmatpush1.msra.mxu0 %v67
    %113 = vmatprep.subr.mxu0 %v70
    %114 = vmatpush1.msra.mxu0 %v69
    %115 = vmatprep.subr.mxu0 %v72
    %116 = vmatpush1.msra.mxu0 %v71
    %117 = vmatprep.subr.mxu0 %v74
    %118 = vmatpush1.msra.mxu0 %v73
    %119 = vmatprep.subr.mxu0 %v76
    %120 = vmatpush1.msra.mxu0 %v75
    %121 = vmatprep.subr.mxu0 %v78
    %122 = vmatpush1.msra.mxu0 %v77
    %123 = vmatprep.subr.mxu0 %v80
    %124 = vmatpush1.msra.mxu0 %v79
    %125 = vmatprep.subr.mxu0 %v82
    %126 = vmatpush1.msra.mxu0 %v81
    %127 = vmatprep.subr.mxu0 %v84
    %128 = vmatpush1.msra.mxu0 %v83
    %129 = vmatprep.subr.mxu0 %v86
    %130 = vmatpush1.msra.mxu0 %v85
    %131 = vmatprep.subr.mxu0 %v88
    %132 = vmatpush1.msra.mxu0 %v87
    %133 = vmatprep.subr.mxu0 %v90
    %134 = vmatpush1.msra.mxu0 %v89
    %135 = vmatprep.subr.mxu0 %v92
    %136 = vmatpush1.msra.mxu0 %v91
    %137 = vmatprep.subr.mxu0 0.0
    %138 = vmatpush1.msra.mxu0 0.0
    %139 = vmatprep.subr.mxu0 0.0
    %140 = vmatpush1.msra.mxu0 0.0
    %141 = vmatprep.subr.mxu0 0.0
    %142 = vmatpush1.msra.mxu0 0.0
    %143 = vmatprep.subr.mxu0 0.0
    %144 = vmatpush1.msra.mxu0 0.0
    %145 = vmatprep.subr.mxu0 0.0
    %146 = vmatpush1.msra.mxu0 0.0
    %147 = vmatprep.subr.mxu0 0.0
    %148 = vmatpush1.msra.mxu0 0.0
    %149 = vmatprep.subr.mxu0 0.0
    %150 = vmatpush1.msra.mxu0 0.0
    %151 = vmatprep.subr.mxu0 0.0
    %152 = vmatpush1.msra.mxu0 0.0
    %153 = vmatprep.subr.mxu0 0.0
    %154 = vmatpush1.msra.mxu0 0.0
    %155 = vmatprep.subr.mxu0 0.0
    %156 = vmatpush1.msra.mxu0 0.0
    %157 = vmatprep.subr.mxu0 0.0
    %158 = vmatpush1.msra.mxu0 0.0
    %159 = vmatprep.subr.mxu0 0.0
    %160 = vmatpush1.msra.mxu0 0.0
    %161 = vmatprep.subr.mxu0 0.0
    %162 = vmatpush1.msra.mxu0 0.0
    %163 = vmatprep.subr.mxu0 0.0
    %164 = vmatpush1.msra.mxu0 0.0
    %165 = vmatprep.subr.mxu0 0.0
    %166 = vmatpush1.msra.mxu0 0.0
    %167 = vmatprep.subr.mxu0 0.0
    %168 = vmatpush1.msra.mxu0 0.0
    %169 = vmatprep.mubr.f32.mxu0 0.0
    %170 = vmatmul.mubr.f32.gmra.mrb[0].mxu0 %v60
    %v171 = vpop.f32.mrb[0].mxu0
    %v172 = vadd.f32 %v98, %v171
    %v173 = vpop.f32.mrb[0].mxu0
    %v174 = vadd.f32 %v102, %v173
    %175 = vdwg.mxu0
    %v176 = vmax.f32 %v172, 0.0
    %v177 = vld [vmem:[#allocation7] sm:$0xff]
    %v178 = vld [vmem:[#allocation7 + $0x8] sm:$0xff]
    %v179 = vld [vmem:[#allocation7 + $0x10] sm:$0xff]
    %v180 = vld [vmem:[#allocation7 + $0x18] sm:$0xff]
    %v181 = vld [vmem:[#allocation7 + $0x20] sm:$0xff]
    %v182 = vld [vmem:[#allocation7 + $0x28] sm:$0xff]
    %v183 = vld [vmem:[#allocation7 + $0x30] sm:$0xff]
    %v184 = vld [vmem:[#allocation7 + $0x38] sm:$0xff]
    %v185 = vld [vmem:[#allocation7 + $0x40] sm:$0xff]
    %v186 = vld [vmem:[#allocation7 + $0x48] sm:$0xff]
    %v187 = vld [vmem:[#allocation7 + $0x50] sm:$0xff]
    %v188 = vld [vmem:[#allocation7 + $0x58] sm:$0xff]
    %v189 = vld [vmem:[#allocation7 + $0x60] sm:$0xff]
    %v190 = vld [vmem:[#allocation7 + $0x68] sm:$0xff]
    %v191 = vld [vmem:[#allocation7 + $0x70] sm:$0xff]
    %v192 = vld [vmem:[#allocation7 + $0x78] sm:$0xff]
    %v193 = vld [vmem:[%s4] sm:$0x1]
    %v195 = vlaneseq
    %v196 = vshrl.u32 %v195, 7
    %v197 = vsub.s32 0, %v196
    %v198 = vrot.slane %v193, %v197
    %200 = vmatprep.subr.mxu0 0.0
    %201 = vmatpush1.msra.mxu0 %v177
    %202 = vmatprep.subr.mxu0 0.0
    %203 = vmatpush1.msra.mxu0 %v178
    %204 = vmatprep.subr.mxu0 0.0
    %205 = vmatpush1.msra.mxu0 %v179
    %206 = vmatprep.subr.mxu0 0.0
    %207 = vmatpush1.msra.mxu0 %v180
    %208 = vmatprep.subr.mxu0 0.0
    %209 = vmatpush1.msra.mxu0 %v181
    %210 = vmatprep.subr.mxu0 0.0
    %211 = vmatpush1.msra.mxu0 %v182
    %212 = vmatprep.subr.mxu0 0.0
    %213 = vmatpush1.msra.mxu0 %v183
    %214 = vmatprep.subr.mxu0 0.0
    %215 = vmatpush1.msra.mxu0 %v184
    %216 = vmatprep.subr.mxu0 0.0
    %217 = vmatpush1.msra.mxu0 %v185
    %218 = vmatprep.subr.mxu0 0.0
    %219 = vmatpush1.msra.mxu0 %v186
    %220 = vmatprep.subr.mxu0 0.0
    %221 = vmatpush1.msra.mxu0 %v187
    %222 = vmatprep.subr.mxu0 0.0
    %223 = vmatpush1.msra.mxu0 %v188
    %224 = vmatprep.subr.mxu0 0.0
    %225 = vmatpush1.msra.mxu0 %v189
    %226 = vmatprep.subr.mxu0 0.0
    %227 = vmatpush1.msra.mxu0 %v190
    %228 = vmatprep.subr.mxu0 0.0
    %229 = vmatpush1.msra.mxu0 %v191
    %230 = vmatprep.subr.mxu0 0.0
    %231 = vmatpush1.msra.mxu0 %v192
    %232 = vmatprep.subr.mxu0 0.0
    %233 = vmatpush1.msra.mxu0 0.0
    %234 = vmatprep.subr.mxu0 0.0
    %235 = vmatpush1.msra.mxu0 0.0
    %236 = vmatprep.subr.mxu0 0.0
    %237 = vmatpush1.msra.mxu0 0.0
    %238 = vmatprep.subr.mxu0 0.0
    %239 = vmatpush1.msra.mxu0 0.0
    %240 = vmatprep.subr.mxu0 0.0
    %241 = vmatpush1.msra.mxu0 0.0
    %242 = vmatprep.subr.mxu0 0.0
    %243 = vmatpush1.msra.mxu0 0.0
    %244 = vmatprep.subr.mxu0 0.0
    %245 = vmatpush1.msra.mxu0 0.0
    %246 = vmatprep.subr.mxu0 0.0
    %247 = vmatpush1.msra.mxu0 0.0
    %248 = vmatprep.subr.mxu0 0.0
    %249 = vmatpush1.msra.mxu0 0.0
    %250 = vmatprep.subr.mxu0 0.0
    %251 = vmatpush1.msra.mxu0 0.0
    %252 = vmatprep.subr.mxu0 0.0
    %253 = vmatpush1.msra.mxu0 0.0
    %254 = vmatprep.subr.mxu0 0.0
    %255 = vmatpush1.msra.mxu0 0.0
    %256 = vmatprep.subr.mxu0 0.0
    %257 = vmatpush1.msra.mxu0 0.0
    %258 = vmatprep.subr.mxu0 0.0
    %259 = vmatpush1.msra.mxu0 0.0
    %260 = vmatprep.subr.mxu0 0.0
    %261 = vmatpush1.msra.mxu0 0.0
    %262 = vmatprep.subr.mxu0 0.0
    %263 = vmatpush1.msra.mxu0 0.0
    %264 = vmatprep.mubr.f32.mxu0 0.0
    %265 = vmatmul.mubr.f32.gmra.mrb[0].mxu0 %v176
    %v266 = vpop.f32.mrb[0].mxu0
    %v267 = vadd.f32 %v198, %v266
    %v268 = vpop.f32.mrb[0].mxu0
    %269 = vdwg.mxu0
    %v270 = vadd.f32 %v267, %v174
    %271 = vst [vmem:[#allocation8] sm:$0xff] %v270
    // Predicated region
    $region34: #{tpu_custom_call.1} parent=1 // pred_check
      _
    $region35: #{tpu_custom_call.1} parent=1 // pred_check_branch
      %273 = sbr.rel (0) target = $region37
    $region36: #{tpu_custom_call.1} parent=1 // pred_region
      %s275 = ssub.s32 128, 128
      %276 = vsyncadd [#allocation4], %s275
      %s278 = sshll.u32 [#allocation8], 4
      %s279 = int_to_ptr.vmem [resolvable:$true] %s278
      %281 = dma.vmem_to_hbm [thread:$0]  %s279, 128, %s5, [#allocation4]
    $region37: #{tpu_custom_call.1} parent=1 // pred_fallthru
      _
    // Predicated region
    $region38: #{tpu_custom_call.1} parent=1 // pred_check
      _
    $region39: #{tpu_custom_call.1} parent=1 // pred_check_branch
      %283 = sbr.rel (0) target = $region41
    $region40: #{tpu_custom_call.1} parent=1 // pred_region
      %284 = dma.done [#allocation4], 128
    $region41: #{tpu_custom_call.1} parent=1 // pred_fallthru
      _
    %285 = vsyncpa [#allocation3], 1
    %286 = vsyncpa [#allocation6], 1
    %287 = vsyncpa [#allocation4], 1

</llo_original>
